<compile_context>
chip_gen: v5e
topology: v5e:2x2
jax: 0.10.0
libtpu: 0.0.40
codegen_flags: <defaults>
</compile_context>

<pallas_src>
import jax
import jax.numpy as jnp
from jax import lax
from jax.experimental import pallas as pl
from jax.experimental.pallas import tpu as pltpu


def _round_up(x, m):
    return (x + m - 1) // m * m


def _downsampling_kernel(p_ref, w_ref, b_ref, o_ref):
    # p_ref: (1, TM, Kp)  bf16 im2col patches (K only 16-aligned, not 128-padded)
    # w_ref: (Kp, TN)     bf16 conv weight with BN scale folded in (folded in f32)
    # b_ref: (1, TN)      f32 folded BatchNorm bias
    # o_ref: (1, TM, TN)  bf16 output tile
    acc = jnp.dot(p_ref[0], w_ref[...], preferred_element_type=jnp.float32)
    y = acc + b_ref[...]                                    # folded BN (scale in weight)
    o_ref[0] = jnp.maximum(y, 0.1 * y).astype(o_ref.dtype)  # LeakyReLU(0.1)


def downsampling_pallas(x_nchw, w_oihw, gamma, beta, run_mean, run_var,
                        eps=1e-5, compute_dtype=jnp.bfloat16,
                        out_dtype=jnp.bfloat16, tile_m=512, return_nchw=True):
    """x_nchw: (N, Cin, H, W); returns (N, Cout, Ho, Wo) like the torch module
    (or NHWC if return_nchw=False, which saves one HBM transpose pass)."""
    N, Cin, H, W = x_nchw.shape
    Cout = w_oihw.shape[0]
    Ho = (H - 1) // 2 + 1
    Wo = (W - 1) // 2 + 1
    K = 9 * Cin
    M = Ho * Wo

    # ---- wrapper: NCHW -> NHWC, spatial pad, im2col via 9 static strided slices ----
    x = jnp.transpose(x_nchw, (0, 2, 3, 1)).astype(compute_dtype)   # NHWC bf16
    xpad = jnp.pad(x, ((0, 0), (1, 1), (1, 1), (0, 0)))             # (N, H+2, W+2, Cin)
    cols = []
    for ky in range(3):
        for kx in range(3):
            cols.append(xpad[:, ky:ky + 2 * Ho - 1:2, kx:kx + 2 * Wo - 1:2, :])
    patches = jnp.concatenate(cols, axis=-1).reshape(N, M, K)       # (N, M, 9*Cin)

    # tiling: K only rounded to bf16 sublane packing (16), Cout to lanes (128)
    Kp = _round_up(K, 16)
    Cp = _round_up(max(Cout, 128), 128)
    TM = tile_m if M >= tile_m else _round_up(M, 16)
    Mp = _round_up(M, TM)
    TN = 256 if (Cp % 256 == 0 and Cout >= 256) else 128            # 256 for big layers

    patches = jnp.pad(patches, ((0, 0), (0, Mp - M), (0, Kp - K)))

    # eval-mode BatchNorm folded: scale -> weight columns (f32, then bf16), bias separate
    scale = (gamma / jnp.sqrt(run_var + eps)).astype(jnp.float32)
    bias = (beta - run_mean * scale).astype(jnp.float32)
    w_folded = w_oihw.astype(jnp.float32) * scale[:, None, None, None]
    # (Cout,Cin,3,3) -> (ky,kx,cin,cout) -> (K,Cout), matching the patch K order
    w_mat = jnp.transpose(w_folded, (2, 3, 1, 0)).reshape(K, Cout).astype(compute_dtype)
    w_mat = jnp.pad(w_mat, ((0, Kp - K), (0, Cp - Cout)))
    bias_row = jnp.pad(bias, (0, Cp - Cout)).reshape(1, Cp)

    # per-step VMEM footprint (double-buffered) -> scoped limit with headroom, v7x-safe
    esize = jnp.dtype(compute_dtype).itemsize
    osize = jnp.dtype(out_dtype).itemsize
    need = 2 * (TM * Kp * esize + Kp * TN * esize + TN * 4 + TM * TN * osize)
    vmem_limit = int(min(max(2 * need + (8 << 20), 32 << 20), 64 << 20))

    out = pl.pallas_call(
        _downsampling_kernel,
        out_shape=jax.ShapeDtypeStruct((N, Mp, Cp), out_dtype),
        grid_spec=pltpu.PrefetchScalarGridSpec(
            num_scalar_prefetch=0,
            grid=(N, Mp // TM, Cp // TN),          # Cout-block innermost: patch tile stays resident
            in_specs=[
                pl.BlockSpec((1, TM, Kp), lambda n, m, c: (n, m, 0)),
                pl.BlockSpec((Kp, TN), lambda n, m, c: (0, c)),
                pl.BlockSpec((1, TN), lambda n, m, c: (0, c)),
            ],
            out_specs=pl.BlockSpec((1, TM, TN), lambda n, m, c: (n, m, c)),
        ),
        compiler_params=pltpu.CompilerParams(
            dimension_semantics=("parallel", "parallel", "parallel"),
            vmem_limit_bytes=vmem_limit,
        ),
    )(patches, w_mat, bias_row)

    out = out[:, :M, :Cout].reshape(N, Ho, Wo, Cout)
    if return_nchw:
        out = jnp.transpose(out, (0, 3, 1, 2))                      # match torch NCHW
    return out


def _reference(x_nchw, w_oihw, gamma, beta, run_mean, run_var, eps=1e-5,
               fold_scale_into_weight=False, round_bf16=False):
    scale = gamma / jnp.sqrt(run_var + eps)
    bias = beta - run_mean * scale
    w = w_oihw.astype(jnp.float32)
    x = x_nchw.astype(jnp.float32)
    if fold_scale_into_weight:
        w = w * scale[:, None, None, None]
    if round_bf16:
        w = w.astype(jnp.bfloat16).astype(jnp.float32)
        x = x.astype(jnp.bfloat16).astype(jnp.float32)
    y = lax.conv_general_dilated(x, w, window_strides=(2, 2),
                                 padding=((1, 1), (1, 1)),
                                 dimension_numbers=("NCHW", "OIHW", "NCHW"))
    if fold_scale_into_weight:
        y = y + bias[None, :, None, None]
    else:
        y = y * scale[None, :, None, None] + bias[None, :, None, None]
    return jnp.maximum(y, 0.1 * y)


if __name__ == "__main__":
    N, Cin, Cout, H, W = 2, 4, 8, 16, 16

    key = jax.random.PRNGKey(0)
    kx, kw, kg, kb, km, kv = jax.random.split(key, 6)
    x = jax.random.normal(kx, (N, Cin, H, W), jnp.float32)
    w = jax.random.normal(kw, (Cout, Cin, 3, 3), jnp.float32) * 0.1
    gamma = 1.0 + 0.1 * jax.random.normal(kg, (Cout,), jnp.float32)
    beta = 0.1 * jax.random.normal(kb, (Cout,), jnp.float32)
    run_mean = 0.1 * jax.random.normal(km, (Cout,), jnp.float32)
    run_var = jnp.abs(jax.random.normal(kv, (Cout,), jnp.float32)) + 0.5

    out = downsampling_pallas(x, w, gamma, beta, run_mean, run_var)
    out = jax.block_until_ready(out)
    assert out.shape == (N, Cout, H // 2, W // 2), out.shape
    out_f32 = out.astype(jnp.float32)

    # matched reference: bf16-rounded operands (scale folded before rounding), f32 acc
    ref_matched = _reference(x, w, gamma, beta, run_mean, run_var,
                             fold_scale_into_weight=True, round_bf16=True)
    err = float(jnp.max(jnp.abs(out_f32 - ref_matched)))
    assert jnp.allclose(out_f32, ref_matched, rtol=2e-2, atol=2e-2), err

    # sanity vs. full-f32 reference (looser: bf16 operand + bf16 output rounding)
    ref_f32 = _reference(x, w, gamma, beta, run_mean, run_var)
    err32 = float(jnp.max(jnp.abs(out_f32 - ref_f32)))
    assert jnp.allclose(out_f32, ref_f32, rtol=7.5e-2, atol=7.5e-2), err32

    print("KERNEL_OK")
</pallas_src>

<mosaic_0001>
module attributes {stable_mosaic.version = 11 : i64} {
  func.func @_downsampling_kernel(%arg0: i32, %arg1: i32, %arg2: i32, %arg3: memref<1x64x48xbf16, #tpu.memory_space<vmem>>, %arg4: memref<48x128xbf16, #tpu.memory_space<vmem>>, %arg5: memref<1x128xf32, #tpu.memory_space<vmem>>, %arg6: memref<1x64x128xbf16, #tpu.memory_space<vmem>>) attributes {dimension_semantics = [#tpu.dimension_semantics<parallel>, #tpu.dimension_semantics<parallel>, #tpu.dimension_semantics<parallel>], iteration_bounds = array<i64: 2, 1, 1>, scalar_prefetch = 0 : i64, scratch_operands = 0 : i64, tpu.core_type = #tpu.core_type<tc>, window_params = [{transform_indices = @transform_0, window_bounds = array<i64: 1, 64, 48>}, {transform_indices = @transform_1, window_bounds = array<i64: 48, 128>}, {transform_indices = @transform_2, window_bounds = array<i64: 1, 128>}, {transform_indices = @transform_3, window_bounds = array<i64: 1, 64, 128>}]} {
    %c0 = arith.constant 0 : index
    %c0_0 = arith.constant 0 : index
    %c0_1 = arith.constant 0 : index
    %0 = vector.load %arg3[%c0, %c0_0, %c0_1] : memref<1x64x48xbf16, #tpu.memory_space<vmem>>, vector<1x64x48xbf16>
    %1 = vector.shape_cast %0 : vector<1x64x48xbf16> to vector<64x48xbf16>
    %c0_2 = arith.constant 0 : index
    %c0_3 = arith.constant 0 : index
    %2 = vector.load %arg4[%c0_2, %c0_3] : memref<48x128xbf16, #tpu.memory_space<vmem>>, vector<48x128xbf16>
    %cst = arith.constant dense<0.000000e+00> : vector<64x128xf32>
    %3 = tpu.matmul %1, %2, %cst {dimension_numbers = #tpu.dot_dimension_numbers<[1], [0], [0], [1], [0, 0, 1, 1], [], []>} : vector<64x48xbf16>, vector<48x128xbf16>, vector<64x128xf32> -> vector<64x128xf32>
    %c0_4 = arith.constant 0 : index
    %c0_5 = arith.constant 0 : index
    %4 = vector.load %arg5[%c0_4, %c0_5] : memref<1x128xf32, #tpu.memory_space<vmem>>, vector<1x128xf32>
    %5 = vector.broadcast %4 : vector<1x128xf32> to vector<64x128xf32>
    %6 = arith.addf %3, %5 : vector<64x128xf32>
    %cst_6 = arith.constant 1.000000e-01 : f32
    %7 = vector.broadcast %cst_6 : f32 to vector<64x128xf32>
    %8 = arith.mulf %7, %6 : vector<64x128xf32>
    %9 = arith.maximumf %6, %8 : vector<64x128xf32>
    %10 = arith.truncf %9 : vector<64x128xf32> to vector<64x128xbf16>
    %c0_7 = arith.constant 0 : index
    %c0_8 = arith.constant 0 : index
    %c0_9 = arith.constant 0 : index
    %11 = vector.load %arg6[%c0_7, %c0_8, %c0_9] : memref<1x64x128xbf16, #tpu.memory_space<vmem>>, vector<1x64x128xbf16>
    %12 = vector.shape_cast %11 : vector<1x64x128xbf16> to vector<64x128xbf16>
    %13 = vector.shape_cast %10 : vector<64x128xbf16> to vector<1x64x128xbf16>
    tpu.vector_store %arg6[%c0_7, %c0_8, %c0_9], %13 {strides = array<i32>} : memref<1x64x128xbf16, #tpu.memory_space<vmem>>, vector<1x64x128xbf16>,
    return
  }
  func.func @transform_0(%arg0: i32, %arg1: i32, %arg2: i32) -> (i32, i32, i32) {
    %c0_i32 = arith.constant 0 : i32
    %c0_i32_0 = arith.constant 0 : i32
    return %arg0, %arg1, %c0_i32 : i32, i32, i32
  }
  func.func @transform_1(%arg0: i32, %arg1: i32, %arg2: i32) -> (i32, i32) {
    %c0_i32 = arith.constant 0 : i32
    %c0_i32_0 = arith.constant 0 : i32
    return %c0_i32, %arg2 : i32, i32
  }
  func.func @transform_2(%arg0: i32, %arg1: i32, %arg2: i32) -> (i32, i32) {
    %c0_i32 = arith.constant 0 : i32
    %c0_i32_0 = arith.constant 0 : i32
    return %c0_i32, %arg2 : i32, i32
  }
  func.func @transform_3(%arg0: i32, %arg1: i32, %arg2: i32) -> (i32, i32, i32) {
    %c0_i32 = arith.constant 0 : i32
    return %arg0, %arg1, %arg2 : i32, i32, i32
  }
}

</mosaic_0001>

<llo_original>
// kernel: tpu_custom_call.1
$region0: #{tpu_custom_call.1}
  #allocation0 [shape = 'u32[]', space=smem, size = 0x4, offset = 0x4, fixed_abs, tag = 'smem constant byte address 0x4 - core index']
  #allocation1 [shape = 'u32[72,128]{1,0:T(1,128)}', space=vmem, size = 0x9000, scoped, tag = 'internal scratch']
  %s0 = inlined_call_operand.vmem [shape: bf16[2,64,48], index: 0, kind: input, shape index: {}]
  %s1 = inlined_call_operand.vmem [shape: bf16[48,128], index: 1, kind: input, shape index: {}]
  %s2 = inlined_call_operand.vmem [shape: f32[1,128], index: 2, kind: input, shape index: {}]
  %s3 = inlined_call_operand.hbm [shape: bf16[2,64,128], index: 3, kind: output, shape index: {}]
  %s4 = sld [smem:[#allocation0]]
  $region45: #{tpu_custom_call.1} parent=0
    _
  %s6 = ssub.s32 1, %s4
  %s7 = scalar_select 0, %s6, %s4
  $region1: #{tpu_custom_call.1} parent=0
    #allocation2 [shape = 'u8[32768]{0}', space=vmem, size = 0x8000, scoped, tag = 'output window, operand 0']
    #allocation3 [shape = 's32[2]{0}', space=sflag, size = 0x8, scoped, tag = 'scoped memory for tpu_custom_call.1']
    %8 = vsyncpa [#allocation3], 0
    %s9 = scalar_lea.sflag [#allocation3], 1
    %10 = vsyncpa %s9, 0
    loop: start=0, step=1, limit=4
    $region2: #{tpu_custom_call.1} parent=1 // loop_pre_header
      _
    $region3: #{tpu_custom_call.1} parent=1 // loop_header
      %s12 = sphi 0, %s16
      %p13 = scmp.ge.s32.totalorder %s12, 4
      %s19 = sphi 0, %s38
      %s20 = sphi 0, %s34
      %s21 = sphi 0, %s30
      %s22 = sphi 0, %s19
      %s23 = sphi 0, %s20
      %s24 = sphi 0, %s21
      %s25 = sphi 0, %s22
      %s26 = sphi 0, %s23
      %s27 = sphi 0, %s24
      %s43 = sphi 0, %s45
      %s46 = sphi 0, %s43
      %s47 = sphi 0, %s46
      %s63 = sphi 0, %s47
      %s69 = sphi 0, %s71
      %s72 = sphi 0, %s69
      %s73 = sphi 0, %s72
      %s89 = sphi 0, %s73
      %s95 = sphi 0, %s97
      %s98 = sphi 0, %s95
      %s99 = sphi 0, %s98
      %s115 = sphi 0, %s99
      %s125 = sphi 0, %s127
      %s128 = sphi 0, %s125
      %s129 = sphi 0, %s128
      %s145 = sphi 0, %s129
    $region4: #{tpu_custom_call.1} parent=1 // loop_header_branch
      %15 = sbr.rel (%p13) target = $region8
    $region5: #{tpu_custom_call.1} parent=1 // loop_body
      %s17 = ssub.s32 %s12, 1
      %s18 = ssub.s32 %s12, 2
      %s28 = sadd.s32 1, %s21
      %p29 = scmp.ge.s32.totalorder %s28, 1
      %s30 = scalar_select %p29, 0, %s28
      %s31 = sadd.s32 1, %s20
      %s32 = scalar_select %p29, %s31, %s20
      %p33 = scmp.ge.s32.totalorder %s32, 1
      %s34 = scalar_select %p33, 0, %s32
      %s35 = sadd.s32 1, %s19
      %s36 = scalar_select %p33, %s35, %s19
      %p37 = scmp.ge.s32.totalorder %s36, 2
      %s38 = scalar_select %p37, 0, %s36
      %s39 = ssub.s32 %s19, %s38
      %s40 = ssub.s32 %s20, %s34
      %s41 = sor.u32 %s39, %s40
      %p42 = scmp.eq.s32.totalorder %s41, 0
      %s44 = sadd.s32 %s43, 1
      %s45 = scalar_select %p42, %s43, %s44
      %p48 = pneg %p42
      %p49 = scmp.eq.s32.totalorder %s12, 1
      %p50 = por %p48, %p49
      %p51 = scmp.ne.s32.totalorder %s43, %s46
      %p52 = scmp.eq.s32.totalorder %s12, 0
      %p53 = por %p51, %p52
      %p54 = scmp.ne.s32.totalorder %s43, %s46
      %p55 = scmp.eq.s32.totalorder %s17, 1
      %p56 = por %p54, %p55
      %p57 = scmp.ne.s32.totalorder %s46, %s47
      %p58 = scmp.eq.s32.totalorder %s17, 0
      %p59 = por %p57, %p58
      %p60 = scmp.ne.s32.totalorder %s46, %s47
      %p61 = scmp.eq.s32.totalorder %s18, 1
      %p62 = por %p60, %p61
      %p64 = scmp.ne.s32.totalorder %s47, %s63
      %p65 = scmp.eq.s32.totalorder %s18, 0
      %p66 = por %p64, %p65
      %s67 = ssub.s32 %s21, %s30
      %p68 = scmp.eq.s32.totalorder %s67, 0
      %s70 = sadd.s32 %s69, 1
      %s71 = scalar_select %p68, %s69, %s70
      %p74 = pneg %p68
      %p75 = scmp.eq.s32.totalorder %s12, 1
      %p76 = por %p74, %p75
      %p77 = scmp.ne.s32.totalorder %s69, %s72
      %p78 = scmp.eq.s32.totalorder %s12, 0
      %p79 = por %p77, %p78
      %p80 = scmp.ne.s32.totalorder %s69, %s72
      %p81 = scmp.eq.s32.totalorder %s17, 1
      %p82 = por %p80, %p81
      %p83 = scmp.ne.s32.totalorder %s72, %s73
      %p84 = scmp.eq.s32.totalorder %s17, 0
      %p85 = por %p83, %p84
      %p86 = scmp.ne.s32.totalorder %s72, %s73
      %p87 = scmp.eq.s32.totalorder %s18, 1
      %p88 = por %p86, %p87
      %p90 = scmp.ne.s32.totalorder %s73, %s89
      %p91 = scmp.eq.s32.totalorder %s18, 0
      %p92 = por %p90, %p91
      %s93 = ssub.s32 %s21, %s30
      %p94 = scmp.eq.s32.totalorder %s93, 0
      %s96 = sadd.s32 %s95, 1
      %s97 = scalar_select %p94, %s95, %s96
      %p100 = pneg %p94
      %p101 = scmp.eq.s32.totalorder %s12, 1
      %p102 = por %p100, %p101
      %p103 = scmp.ne.s32.totalorder %s95, %s98
      %p104 = scmp.eq.s32.totalorder %s12, 0
      %p105 = por %p103, %p104
      %p106 = scmp.ne.s32.totalorder %s95, %s98
      %p107 = scmp.eq.s32.totalorder %s17, 1
      %p108 = por %p106, %p107
      %p109 = scmp.ne.s32.totalorder %s98, %s99
      %p110 = scmp.eq.s32.totalorder %s17, 0
      %p111 = por %p109, %p110
      %p112 = scmp.ne.s32.totalorder %s98, %s99
      %p113 = scmp.eq.s32.totalorder %s18, 1
      %p114 = por %p112, %p113
      %p116 = scmp.ne.s32.totalorder %s99, %s115
      %p117 = scmp.eq.s32.totalorder %s18, 0
      %p118 = por %p116, %p117
      %s119 = ssub.s32 %s19, %s38
      %s120 = ssub.s32 %s20, %s34
      %s121 = sor.u32 %s119, %s120
      %s122 = ssub.s32 %s21, %s30
      %s123 = sor.u32 %s121, %s122
      %p124 = scmp.eq.s32.totalorder %s123, 0
      %s126 = sadd.s32 %s125, 1
      %s127 = scalar_select %p124, %s125, %s126
      %p130 = pneg %p124
      %p131 = scmp.eq.s32.totalorder %s12, 1
      %p132 = por %p130, %p131
      %p133 = scmp.ne.s32.totalorder %s125, %s128
      %p134 = scmp.eq.s32.totalorder %s12, 0
      %p135 = por %p133, %p134
      %p136 = scmp.ne.s32.totalorder %s125, %s128
      %p137 = scmp.eq.s32.totalorder %s17, 1
      %p138 = por %p136, %p137
      %p139 = scmp.ne.s32.totalorder %s128, %s129
      %p140 = scmp.eq.s32.totalorder %s17, 0
      %p141 = por %p139, %p140
      %p142 = scmp.ne.s32.totalorder %s128, %s129
      %p143 = scmp.eq.s32.totalorder %s18, 1
      %p144 = por %p142, %p143
      %p146 = scmp.ne.s32.totalorder %s129, %s145
      %p147 = scmp.eq.s32.totalorder %s18, 0
      %p148 = por %p146, %p147
      %p149 = scmp.le.s32.totalorder 1, %s12
      %p150 = scmp.lt.s32.totalorder %s12, 3
      %p151 = pnand %p149, %p150
      %p152 = pneg %p151
      // Predicated region
      $region9: #{tpu_custom_call.1} parent=5 // pred_check
        _
      $region10: #{tpu_custom_call.1} parent=5 // pred_check_branch
        %154 = sbr.rel (%p151) target = $region12
      $region11: #{tpu_custom_call.1} parent=5 // pred_region
        %s155 = ssub.s32 %s12, 1
        // Predicated region
        $region13: #{tpu_custom_call.1} parent=11 // pred_check
          %p156 = pneg %p85
        $region14: #{tpu_custom_call.1} parent=11 // pred_check_branch
          %158 = sbr.rel (%p156) target = $region16
        $region15: #{tpu_custom_call.1} parent=11 // pred_region
          %p159 = scmp.lt.s32.totalorder %s24, 0
          %s160 = scalar_select %p159, %s24, 0
          %s161 = smul.addr %s160, 4
          %s162 = scalar_lea.vmem %s1, %s161
        $region16: #{tpu_custom_call.1} parent=11 // pred_fallthru
          _
        // Predicated region
        $region17: #{tpu_custom_call.1} parent=11 // pred_check
          %p163 = pneg %p111
        $region18: #{tpu_custom_call.1} parent=11 // pred_check_branch
          %165 = sbr.rel (%p163) target = $region20
        $region19: #{tpu_custom_call.1} parent=11 // pred_region
          %p166 = scmp.lt.s32.totalorder %s24, 0
          %s167 = scalar_select %p166, %s24, 0
          %s168 = scalar_lea.vmem %s2, %s167
        $region20: #{tpu_custom_call.1} parent=11 // pred_fallthru
          _
      $region12: #{tpu_custom_call.1} parent=5 // pred_fallthru
        _
      %p169 = scmp.lt.s32.totalorder %s12, 2
      // Predicated region
      $region21: #{tpu_custom_call.1} parent=5 // pred_check
        %p170 = pneg %p169
      $region22: #{tpu_custom_call.1} parent=5 // pred_check_branch
        %172 = sbr.rel (%p170) target = $region24
      $region23: #{tpu_custom_call.1} parent=5 // pred_region
        // Predicated region
        $region25: #{tpu_custom_call.1} parent=23 // pred_check
          %p173 = pneg %p53
        $region26: #{tpu_custom_call.1} parent=23 // pred_check_branch
          %175 = sbr.rel (%p173) target = $region28
        $region27: #{tpu_custom_call.1} parent=23 // pred_region
          %s176 = smul.u32 8, %s20
          %p177 = scmp.lt.s32.totalorder %s19, 1
          %s178 = scalar_select %p177, %s19, 1
          %p179 = scmp.lt.s32.totalorder %s176, 7
          %s180 = scalar_select %p179, %s176, 7
          %s181 = smul.addr %s178, 8
          %s182 = sadd.s32 %s180, %s181
          %s183 = smul.addr %s182, 4
          %s184 = scalar_lea.vmem %s0, %s183
          %s185 = smul.u32 8, %s20
        $region28: #{tpu_custom_call.1} parent=23 // pred_fallthru
          _
      $region24: #{tpu_custom_call.1} parent=5 // pred_fallthru
        _
      %p186 = scmp.le.s32.totalorder 1, %s12
      %p187 = scmp.lt.s32.totalorder %s12, 3
      %p188 = pnand %p186, %p187
      %p189 = pneg %p188
      // Predicated region
      $region29: #{tpu_custom_call.1} parent=5 // pred_check
        _
      $region30: #{tpu_custom_call.1} parent=5 // pred_check_branch
        %191 = sbr.rel (%p188) target = $region32
      $region31: #{tpu_custom_call.1} parent=5 // pred_region
        %s192 = ssub.s32 %s12, 1
        %s193 = smul.u32 8, %s23
        %p194 = scmp.lt.s32.totalorder %s22, 1
        %s195 = scalar_select %p194, %s22, 1
        %p196 = scmp.lt.s32.totalorder %s193, 7
        %s197 = scalar_select %p196, %s193, 7
        %s198 = smul.addr %s195, 8
        %s199 = sadd.s32 %s197, %s198
        %s200 = smul.addr %s199, 4
        %s201 = scalar_lea.vmem %s0, %s200
        %p202 = pneg %p59
        %p203 = pneg %p56
        %p204 = scmp.lt.s32.totalorder %s24, 0
        %s205 = scalar_select %p204, %s24, 0
        %s206 = smul.addr %s205, 4
        %s207 = scalar_lea.vmem %s1, %s206
        %p208 = pneg %p85
        %p209 = pneg %p82
        %p210 = scmp.lt.s32.totalorder %s24, 0
        %s211 = scalar_select %p210, %s24, 0
        %s212 = scalar_lea.vmem %s2, %s211
        %p213 = pneg %p111
        %p214 = pneg %p108
        %p215 = pneg %p141
        %p216 = pneg %p138
        %s217 = sand.u32 %s128, 1
        %s218 = scalar_lea.sflag [#allocation3], %s217
        %s219 = sand.u32 %s128, 1
        %s220 = smul.addr %s219, 32
        %s221 = scalar_lea.vmem [#allocation2], %s220
        %s222 = smul.u32 8, %s23
        %p223 = scmp.lt.s32.totalorder %s22, 1
        %s224 = scalar_select %p223, %s22, 1
        %p225 = scmp.lt.s32.totalorder %s222, 7
        %s226 = scalar_select %p225, %s222, 7
        %s227 = smul.addr %s224, 8
        %s228 = sadd.s32 %s226, %s227
        %s229 = smul.addr %s228, 4
        %s230 = scalar_lea.vmem %s0, %s229
        %s231 = smul.u32 8, %s23
        %p232 = scmp.lt.s32.totalorder %s24, 0
        %s233 = scalar_select %p232, %s24, 0
        %s234 = smul.addr %s233, 4
        %s235 = scalar_lea.vmem %s1, %s234
        %p236 = scmp.lt.s32.totalorder %s24, 0
        %s237 = scalar_select %p236, %s24, 0
        %s238 = scalar_lea.vmem %s2, %s237
        %s239 = smul.u32 8, %s23
        %v241 = vld [vmem:[%s230] sm:$0xf]
        %v242 = vld [vmem:[%s230 + $0x4] sm:$0xf]
        %v243 = vld [vmem:[%s230 + $0x8] sm:$0xf]
        %v244 = vld [vmem:[%s230 + $0xc] sm:$0xf]
        %v245 = vld [vmem:[%s230 + $0x10] sm:$0xf]
        %v246 = vld [vmem:[%s230 + $0x14] sm:$0xf]
        %v247 = vld [vmem:[%s230 + $0x18] sm:$0xf]
        %v248 = vld [vmem:[%s230 + $0x1c] sm:$0xf]
        %v249 = vld [vmem:[%s235] sm:$0xf]
        %v250 = vld [vmem:[%s235 + $0x4] sm:$0xf]
        %v251 = vld [vmem:[%s235 + $0x8] sm:$0xf]
        %v252 = vld [vmem:[%s235 + $0xc] sm:$0xf]
        %v253 = vld [vmem:[%s235 + $0x10] sm:$0xf]
        %v254 = vld [vmem:[%s235 + $0x14] sm:$0xf]
        %v255 = vld [vmem:[%s238] sm:$0x1]
        %v257 = vperm.slane %v255, 0
        %v267 = vunpack.c.l.b16 %v241
        %v268 = vunpack.c.l.b16 %v242
        %v269 = vunpack.c.l.b16 %v243
        %v270 = vunpack.c.l.b16 %v244
        %v271 = vunpack.c.l.b16 %v245
        %v272 = vunpack.c.l.b16 %v246
        %v273 = vunpack.c.l.b16 %v247
        %v274 = vunpack.c.l.b16 %v248
        %v275 = vpack.c.b16 %v268, %v267
        %v276 = vpack.c.b16 %v270, %v269
        %v277 = vpack.c.b16 %v272, %v271
        %v278 = vpack.c.b16 %v274, %v273
        %v285 = vunpack.c.l.b16 %v249
        %v286 = vunpack.c.l.b16 %v250
        %v287 = vunpack.c.l.b16 %v251
        %v288 = vunpack.c.l.b16 %v252
        %v289 = vunpack.c.l.b16 %v253
        %v290 = vunpack.c.l.b16 %v254
        %v291 = vpack.c.b16 %v286, %v285
        %v292 = vpack.c.b16 %v288, %v287
        %v293 = vpack.c.b16 %v290, %v289
        %vm297 = vcmask 392192
        %v299 = vsel %vm297, %v275, 0
        %v302 = vsel %vm297, %v276, 0
        %v305 = vsel %vm297, %v277, 0
        %v308 = vsel %vm297, %v278, 0
        %310 = vmatpush.bf16.msra.mxu0 0
        %311 = vmatpush.bf16.msra.mxu0 0
        %312 = vmatpush.bf16.msra.mxu0 0
        %313 = vmatpush.bf16.msra.mxu0 0
        %314 = vmatpush.bf16.msra.mxu0 0
        %315 = vmatpush.bf16.msra.mxu0 %v293
        %316 = vmatpush.bf16.msra.mxu0 %v292
        %317 = vmatpush.bf16.msra.mxu0 %v291
        %318 = vmatmul.bf16.gmra.mxu0 %v299
        %v319 = vpop.f32.mrf.mxu0
        %v320 = vadd.f32 %v257, %v319
        %v321 = vpop.f32.mrf.mxu0
        %v322 = vadd.f32 %v257, %v321
        %323 = vmatmul.bf16.gmra.mxu0 %v302
        %v324 = vpop.f32.mrf.mxu0
        %v325 = vadd.f32 %v257, %v324
        %v326 = vpop.f32.mrf.mxu0
        %v327 = vadd.f32 %v257, %v326
        %328 = vmatmul.bf16.gmra.mxu0 %v305
        %v329 = vpop.f32.mrf.mxu0
        %v330 = vadd.f32 %v257, %v329
        %v331 = vpop.f32.mrf.mxu0
        %v332 = vadd.f32 %v257, %v331
        %333 = vmatmul.bf16.gmra.mxu0 %v308
        %v334 = vpop.f32.mrf.mxu0
        %v335 = vadd.f32 %v257, %v334
        %v336 = vpop.f32.mrf.mxu0
        %v337 = vadd.f32 %v257, %v336
        %338 = vdwg.mxu0
        %v339 = vmul.f32 %v320, 0.1
        %v340 = vmul.f32 %v322, 0.1
        %v341 = vmul.f32 %v325, 0.1
        %v342 = vmul.f32 %v327, 0.1
        %v343 = vmul.f32 %v330, 0.1
        %v344 = vmul.f32 %v332, 0.1
        %v345 = vmul.f32 %v335, 0.1
        %v346 = vmul.f32 %v337, 0.1
        %v347 = vmax.f32 %v320, %v339
        %v348 = vmax.f32 %v322, %v340
        %v349 = vmax.f32 %v325, %v341
        %v350 = vmax.f32 %v327, %v342
        %v351 = vmax.f32 %v330, %v343
        %v352 = vmax.f32 %v332, %v344
        %v353 = vmax.f32 %v335, %v345
        %v354 = vmax.f32 %v337, %v346
        %v355 = vpack.c.bf16 %v347, %v347
        %v356 = vpack.c.bf16 %v348, %v348
        %v357 = vpack.c.bf16 %v349, %v349
        %v358 = vpack.c.bf16 %v350, %v350
        %v359 = vpack.c.bf16 %v351, %v351
        %v360 = vpack.c.bf16 %v352, %v352
        %v361 = vpack.c.bf16 %v353, %v353
        %v362 = vpack.c.bf16 %v354, %v354
        %363 = vst [vmem:[%s221] sm:$0xf] %v355
        %364 = vst [vmem:[%s221 + $0x4] sm:$0xf] %v356
        %365 = vst [vmem:[%s221 + $0x8] sm:$0xf] %v357
        %366 = vst [vmem:[%s221 + $0xc] sm:$0xf] %v358
        %367 = vst [vmem:[%s221 + $0x10] sm:$0xf] %v359
        %368 = vst [vmem:[%s221 + $0x14] sm:$0xf] %v360
        %369 = vst [vmem:[%s221 + $0x18] sm:$0xf] %v361
        %370 = vst [vmem:[%s221 + $0x1c] sm:$0xf] %v362
        %s371 = sand.u32 %s128, 1
        %s372 = scalar_lea.sflag [#allocation3], %s371
        %s373 = sand.u32 %s128, 1
        %s374 = smul.addr %s373, 32
        %s375 = scalar_lea.vmem [#allocation2], %s374
        // Predicated region
        $region33: #{tpu_custom_call.1} parent=31 // pred_check
          %p376 = pneg %p138
        $region34: #{tpu_custom_call.1} parent=31 // pred_check_branch
          %378 = sbr.rel (%p376) target = $region36
        $region35: #{tpu_custom_call.1} parent=31 // pred_region
          %s379 = smul.u32 8, %s23
          %381 = vsyncadd %s372, 0
          %s382 = sadd.s32 %s24, %s379
          %s383 = smul.addr %s22, 8
          %s384 = sadd.s32 %s382, %s383
          %s385 = smul.addr %s384, 4
          %s386 = scalar_lea.hbm %s3, %s385
          %s387 = sshll.u32 %s375, 4
          %s388 = int_to_ptr.vmem [resolvable:$true] %s387
          %s389 = sshll.u32 %s386, 4
          %s390 = int_to_ptr.hbm [resolvable:$true] %s389
          %395 = dma.vmem_to_hbm [thread:$0]  %s388, 512, %s390, %s372, 64, 64, 4
        $region36: #{tpu_custom_call.1} parent=31 // pred_fallthru
          _
      $region32: #{tpu_custom_call.1} parent=5 // pred_fallthru
        _
      %p396 = scmp.le.s32.totalorder 2, %s12
      // Predicated region
      $region37: #{tpu_custom_call.1} parent=5 // pred_check
        %p397 = pneg %p396
      $region38: #{tpu_custom_call.1} parent=5 // pred_check_branch
        %399 = sbr.rel (%p397) target = $region40
      $region39: #{tpu_custom_call.1} parent=5 // pred_region
        %s400 = ssub.s32 %s12, 2
        // Predicated region
        $region41: #{tpu_custom_call.1} parent=39 // pred_check
          %p401 = pneg %p144
        $region42: #{tpu_custom_call.1} parent=39 // pred_check_branch
          %403 = sbr.rel (%p401) target = $region44
        $region43: #{tpu_custom_call.1} parent=39 // pred_region
          %s404 = sand.u32 %s129, 1
          %s405 = scalar_lea.sflag [#allocation3], %s404
          %s406 = sand.u32 %s129, 1
          %s407 = smul.addr %s406, 32
          %s408 = scalar_lea.vmem [#allocation2], %s407
          %410 = dma.done %s405, 512
        $region44: #{tpu_custom_call.1} parent=39 // pred_fallthru
          _
      $region40: #{tpu_custom_call.1} parent=5 // pred_fallthru
        _
    $region6: #{tpu_custom_call.1} parent=1 // loop_footer
      %s16 = sadd.s32 1, %s12
    $region7: #{tpu_custom_call.1} parent=1 // loop_footer_branch
      %11 = sbr.rel target = $region3
    $region8: #{tpu_custom_call.1} parent=1 // loop_exit
      _
    %411 = vsyncpa [#allocation3], 1
    %s412 = scalar_lea.sflag [#allocation3], 1
    %413 = vsyncpa %s412, 1

</llo_original>
